<compile_context>
chip_gen: v6e
topology: v6e:2x2x1
jax: 0.10.0
libtpu: 0.0.40
codegen_flags: <defaults>
</compile_context>

<pallas_src>
import jax
import jax.numpy as jnp
from jax import lax
from jax.experimental import pallas as pl
from jax.experimental.pallas import tpu as pltpu

# ---- static problem sizes (small, consistent with the module) ----
B = 2            # batch
C_IN = 4         # in_channels
C_OUT = 8        # out_channels == attention dim
H = 16
W = 16
KH = KW = 3      # conv kernel
NH = 4           # num_heads
HD = C_OUT // NH            # head dim (= 2)
N = H * W                   # tokens per batch after the raw .view
K = C_IN * KH * KW          # 36
SCALE = float(HD) ** -0.5   # (dim // num_heads) ** -0.5

# layout constants of the fused kernel
TG = N // C_OUT          # 32  tokens that share one conv-channel row
LANES = B * TG           # 64  distinct token-grid lanes (lane = 32*b + g)
LANES2 = 2 * LANES       # 128 both halves of every vreg carry real work
NPAIR = NH // 2          # head pairs packed per vreg
NGRP = TG // NH          # 8   4-token remix groups per conv-channel row


# ------------------------- fused Pallas kernel -------------------------

def fused_kernel(patches_ref, wbig_ref, bbig_ref, wep_ref, bep_ref, o_ref):
    # conv folded into qkv: one bf16 MXU dot, f32 accumulation.  Because the
    # RHS lanes 64..127 duplicate lanes 0..63, every qkv channel m arrives as
    # a duplicated (8,128) token grid (cc = n//32, lane%64 = 32*b + n%32).
    qkv = jnp.dot(wbig_ref[...], patches_ref[...],
                  preferred_element_type=jnp.float32) + bbig_ref[...]   # (192,128)

    def chan(m):
        # vreg-aligned row slice (multiples of 8 sublanes) -> no relayout
        return qkv[8 * m: 8 * (m + 1), :]

    lane = lax.broadcasted_iota(jnp.int32, (C_OUT, LANES2), 1)
    lo = lane < LANES

    # q packed by head pair: low lanes = head 2p, high lanes = head 2p+1
    # (head i, dim d  <->  qkv channel 2*i + d; scale folded into the weight)
    pq = [[jnp.where(lo, chan(4 * p + d), chan(4 * p + 2 + d))
           for d in range(HD)] for p in range(NPAIR)]
    # k / v stay duplicated across both halves (shared by both packed heads)
    dk = [[chan(C_OUT + 2 * j + d) for d in range(HD)] for j in range(NH)]
    dv = [[chan(2 * C_OUT + 2 * j + d) for d in range(HD)] for j in range(NH)]

    # attention over the *head* axis per token (as in the reference module):
    # all element-wise on full (8,128) vregs, two heads per op.
    lhs_rows = []
    for p in range(NPAIR):
        s = [pq[p][0] * dk[j][0] + pq[p][1] * dk[j][1] for j in range(NH)]
        mx = jnp.maximum(jnp.maximum(s[0], s[1]), jnp.maximum(s[2], s[3]))
        e = [jnp.exp(sj - mx) for sj in s]
        inv = pl.reciprocal(e[0] + e[1] + e[2] + e[3], approx=True)
        probs = [ej * inv for ej in e]
        pout = [probs[0] * dv[0][d] + probs[1] * dv[1][d]
                + probs[2] * dv[2][d] + probs[3] * dv[3][d]
                for d in range(HD)]                        # (out[2p,d]|out[2p+1,d])
        # repack so the lane-half carries the head-dim d (epilogue contraction):
        # head 2p   -> (d=0 low | d=1 low),  head 2p+1 -> (d=0 high | d=1 high)
        lhs_rows.append(jnp.where(lo, pout[0], pltpu.roll(pout[1], LANES, 1)))
        lhs_rows.append(jnp.where(lo, pltpu.roll(pout[0], LANES, 1), pout[1]))

    # merged token re-mixing (transpose(1,2).reshape) + output projection:
    # one (32,128)@(128,128) MXU dot; the only HBM write is lane-dense (32,128).
    lhs = jnp.concatenate(lhs_rows, axis=0).astype(jnp.bfloat16)        # (32,128)
    o_ref[...] = (jnp.dot(lhs, wep_ref[...], preferred_element_type=jnp.float32)
                  + bep_ref[...])


# ------------------------- wrapper -------------------------

def attention_guided_conv(x, params):
    conv_w, conv_b, w_qkv, w_proj, b_proj = params
    Bx, Ci, Hx, Wx = x.shape
    HWx = Hx * Wx

    # --- im2col (padding=1); contraction rows ordered (c, k), hw = 8*g + c ---
    xp = jnp.pad(x, ((0, 0), (0, 0), (1, 1), (1, 1)))
    cols = []
    for kh in range(KH):
        for kw in range(KW):
            cols.append(xp[:, :, kh:kh + Hx, kw:kw + Wx].reshape(Bx, Ci, HWx))
    patches = jnp.stack(cols, axis=2).reshape(Bx, K, HWx)     # k = 9*ci+3*kh+kw
    pp = patches.reshape(Bx, K, TG, C_OUT)                    # [b, k, g, c]
    p_ck = jnp.transpose(pp, (3, 1, 0, 2)).reshape(C_OUT * K, LANES)   # (288,64)
    # duplicate across both lane halves -> every qkv grid fills a full vreg
    patches_dup = jnp.concatenate([p_ck, p_ck], axis=1).astype(jnp.bfloat16)

    # --- weight pre-arrangement (weight-only; one-time in a real model) ---
    w2 = conv_w.reshape(C_OUT, K)
    w_qkv_s = jnp.concatenate([w_qkv[:C_OUT] * SCALE, w_qkv[C_OUT:]], axis=0)
    # conv folded into qkv: row 8*m + cc, col 36*c + k  =  Wqkv_s[m,c]*Wconv[cc,k]
    w_big = jnp.kron(w_qkv_s, w2).astype(jnp.bfloat16)                  # (192,288)
    # conv bias propagated through qkv: b[8*m+cc] = sum_c Wqkv_s[m,c]*b_conv[cc]
    b_big = jnp.outer(w_qkv_s.sum(axis=1), conv_b).reshape(-1, 1)       # (192,1)
    # merged remix+proj weight: row = 64*d + 32*b + g, col = 64*b' + 8*(g//4) + c'
    # value = delta(b,b') * delta(g//4, m) * Wproj[c', 2*(g%4) + d]
    a = jnp.transpose(w_proj.T.reshape(NH, HD, C_OUT), (1, 0, 2))       # a[d,t,c']
    w_ep = jnp.einsum("bB,gm,dtc->dbgtBmc",
                      jnp.eye(Bx, dtype=w_proj.dtype),
                      jnp.eye(NGRP, dtype=w_proj.dtype), a)
    w_ep = w_ep.reshape(HD * LANES, LANES2).astype(jnp.bfloat16)        # (128,128)
    b_ep = jnp.tile(b_proj, Bx * NGRP).reshape(1, LANES2)               # (1,128)

    y = pl.pallas_call(
        fused_kernel,
        out_shape=jax.ShapeDtypeStruct((NH * C_OUT, LANES2), jnp.float32),
        grid=(1,),
        in_specs=[
            pl.BlockSpec((C_OUT * K, LANES2), lambda i: (0, 0)),
            pl.BlockSpec((3 * C_OUT * C_OUT, C_OUT * K), lambda i: (0, 0)),
            pl.BlockSpec((3 * C_OUT * C_OUT, 1), lambda i: (0, 0)),
            pl.BlockSpec((HD * LANES, LANES2), lambda i: (0, 0)),
            pl.BlockSpec((1, LANES2), lambda i: (0, 0)),
        ],
        out_specs=pl.BlockSpec((NH * C_OUT, LANES2), lambda i: (0, 0)),
        compiler_params=pltpu.CompilerParams(dimension_semantics=("arbitrary",)),
    )(patches_dup, w_big, b_big, w_ep, b_ep)

    # y[8*i + cc, 64*b + 8*m + c'] == x_out[b, 2*i + cc//4, 64*(cc%4) + 8*m + c']
    y5 = y.reshape(NH, 2, 4, Bx, 64)
    out = jnp.transpose(y5, (3, 0, 1, 2, 4)).reshape(Bx, C_OUT, Hx, Wx)
    return out


# ------------------------- pure-JAX reference -------------------------

def ref_forward(x, params):
    conv_w, conv_b, w_qkv, w_proj, b_proj = params
    y = lax.conv_general_dilated(
        x, conv_w, window_strides=(1, 1), padding=((1, 1), (1, 1)),
        dimension_numbers=("NCHW", "OIHW", "NCHW"))
    y = y + conv_b[None, :, None, None]
    Bx, C, Hx, Wx = y.shape
    Nx = Hx * Wx
    xs = y.reshape(Bx, Nx, C)                       # raw .view, as in torch
    qkv = (xs @ w_qkv.T).reshape(Bx, Nx, 3, NH, HD)
    q, k, v = qkv[:, :, 0], qkv[:, :, 1], qkv[:, :, 2]
    attn = jnp.einsum("bnid,bnjd->bnij", q, k) * SCALE
    attn = jax.nn.softmax(attn, axis=-1)
    out = jnp.einsum("bnij,bnjd->bnid", attn, v)
    out = jnp.transpose(out, (0, 2, 1, 3)).reshape(Bx, Nx, C)
    out = out @ w_proj.T + b_proj
    return out.reshape(Bx, C, Hx, Wx)               # raw .view, as in torch


if __name__ == "__main__":
    key = jax.random.PRNGKey(0)
    kx, k1, k2, k3, k4, k5 = jax.random.split(key, 6)
    x = jax.random.normal(kx, (B, C_IN, H, W), dtype=jnp.float32)
    conv_w = jax.random.normal(k1, (C_OUT, C_IN, KH, KW), dtype=jnp.float32) * 0.1
    conv_b = jax.random.normal(k2, (C_OUT,), dtype=jnp.float32) * 0.1
    w_qkv = jax.random.normal(k3, (3 * C_OUT, C_OUT), dtype=jnp.float32) * 0.1
    w_proj = jax.random.normal(k4, (C_OUT, C_OUT), dtype=jnp.float32) * 0.1
    b_proj = jax.random.normal(k5, (C_OUT,), dtype=jnp.float32) * 0.1
    params = (conv_w, conv_b, w_qkv, w_proj, b_proj)

    out = jax.jit(attention_guided_conv)(x, params)
    out = jax.block_until_ready(out)

    ref = ref_forward(x, params)
    assert out.shape == (B, C_OUT, H, W)
    # bf16 MXU operands + approx-reciprocal softmax -> slightly relaxed
    # (still tight) tolerance vs. the f32 reference.
    if not jnp.allclose(out, ref, rtol=5e-3, atol=3e-3):
        max_err = float(jnp.max(jnp.abs(out - ref)))
        raise AssertionError(f"mismatch vs reference, max abs err {max_err}")
    print("KERNEL_OK")
</pallas_src>

<mosaic_0001>
module attributes {stable_mosaic.version = 11 : i64} {
  func.func @fused_kernel(%arg0: i32, %arg1: memref<288x128xbf16, #tpu.memory_space<vmem>>, %arg2: memref<192x288xbf16, #tpu.memory_space<vmem>>, %arg3: memref<192x1xf32, #tpu.memory_space<vmem>>, %arg4: memref<128x128xbf16, #tpu.memory_space<vmem>>, %arg5: memref<1x128xf32, #tpu.memory_space<vmem>>, %arg6: memref<32x128xf32, #tpu.memory_space<vmem>>) attributes {dimension_semantics = [#tpu.dimension_semantics<arbitrary>], iteration_bounds = array<i64: 1>, scalar_prefetch = 0 : i64, scratch_operands = 0 : i64, tpu.core_type = #tpu.core_type<tc>, window_params = [{pipeline_mode = #tpu.pipeline_mode<synchronous>, transform_indices = @transform_0, window_bounds = array<i64: 288, 128>}, {pipeline_mode = #tpu.pipeline_mode<synchronous>, transform_indices = @transform_1, window_bounds = array<i64: 192, 288>}, {pipeline_mode = #tpu.pipeline_mode<synchronous>, transform_indices = @transform_2, window_bounds = array<i64: 192, 1>}, {pipeline_mode = #tpu.pipeline_mode<synchronous>, transform_indices = @transform_3, window_bounds = array<i64: 128, 128>}, {pipeline_mode = #tpu.pipeline_mode<synchronous>, transform_indices = @transform_4, window_bounds = array<i64: 1, 128>}, {pipeline_mode = #tpu.pipeline_mode<synchronous>, transform_indices = @transform_5, window_bounds = array<i64: 32, 128>}]} {
    %c0 = arith.constant 0 : index
    %c0_0 = arith.constant 0 : index
    %0 = vector.load %arg2[%c0, %c0_0] : memref<192x288xbf16, #tpu.memory_space<vmem>>, vector<192x288xbf16>
    %c0_1 = arith.constant 0 : index
    %c0_2 = arith.constant 0 : index
    %1 = vector.load %arg1[%c0_1, %c0_2] : memref<288x128xbf16, #tpu.memory_space<vmem>>, vector<288x128xbf16>
    %cst = arith.constant dense<0.000000e+00> : vector<192x128xf32>
    %2 = tpu.matmul %0, %1, %cst {dimension_numbers = #tpu.dot_dimension_numbers<[1], [0], [0], [1], [0, 0, 1, 1], [], []>} : vector<192x288xbf16>, vector<288x128xbf16>, vector<192x128xf32> -> vector<192x128xf32>
    %c0_3 = arith.constant 0 : index
    %c0_4 = arith.constant 0 : index
    %3 = vector.load %arg3[%c0_3, %c0_4] : memref<192x1xf32, #tpu.memory_space<vmem>>, vector<192x1xf32>
    %4 = vector.broadcast %3 : vector<192x1xf32> to vector<192x128xf32>
    %5 = arith.addf %2, %4 : vector<192x128xf32>
    %6 = tpu.iota {dimensions = array<i32: 1>} : vector<8x128xi32>
    %c64_i32 = arith.constant 64 : i32
    %7 = vector.broadcast %c64_i32 : i32 to vector<8x128xi32>
    %8 = arith.cmpi slt, %6, %7 : vector<8x128xi32>
    %9 = vector.extract_strided_slice %5 {offsets = [0, 0], sizes = [8, 128], strides = [1, 1]} : vector<192x128xf32> to vector<8x128xf32>
    %10 = vector.extract_strided_slice %5 {offsets = [16, 0], sizes = [8, 128], strides = [1, 1]} : vector<192x128xf32> to vector<8x128xf32>
    %11 = arith.select %8, %9, %10 : vector<8x128xi1>, vector<8x128xf32>
    %12 = vector.extract_strided_slice %5 {offsets = [8, 0], sizes = [8, 128], strides = [1, 1]} : vector<192x128xf32> to vector<8x128xf32>
    %13 = vector.extract_strided_slice %5 {offsets = [24, 0], sizes = [8, 128], strides = [1, 1]} : vector<192x128xf32> to vector<8x128xf32>
    %14 = arith.select %8, %12, %13 : vector<8x128xi1>, vector<8x128xf32>
    %15 = vector.extract_strided_slice %5 {offsets = [32, 0], sizes = [8, 128], strides = [1, 1]} : vector<192x128xf32> to vector<8x128xf32>
    %16 = vector.extract_strided_slice %5 {offsets = [48, 0], sizes = [8, 128], strides = [1, 1]} : vector<192x128xf32> to vector<8x128xf32>
    %17 = arith.select %8, %15, %16 : vector<8x128xi1>, vector<8x128xf32>
    %18 = vector.extract_strided_slice %5 {offsets = [40, 0], sizes = [8, 128], strides = [1, 1]} : vector<192x128xf32> to vector<8x128xf32>
    %19 = vector.extract_strided_slice %5 {offsets = [56, 0], sizes = [8, 128], strides = [1, 1]} : vector<192x128xf32> to vector<8x128xf32>
    %20 = arith.select %8, %18, %19 : vector<8x128xi1>, vector<8x128xf32>
    %21 = vector.extract_strided_slice %5 {offsets = [64, 0], sizes = [8, 128], strides = [1, 1]} : vector<192x128xf32> to vector<8x128xf32>
    %22 = vector.extract_strided_slice %5 {offsets = [72, 0], sizes = [8, 128], strides = [1, 1]} : vector<192x128xf32> to vector<8x128xf32>
    %23 = vector.extract_strided_slice %5 {offsets = [80, 0], sizes = [8, 128], strides = [1, 1]} : vector<192x128xf32> to vector<8x128xf32>
    %24 = vector.extract_strided_slice %5 {offsets = [88, 0], sizes = [8, 128], strides = [1, 1]} : vector<192x128xf32> to vector<8x128xf32>
    %25 = vector.extract_strided_slice %5 {offsets = [96, 0], sizes = [8, 128], strides = [1, 1]} : vector<192x128xf32> to vector<8x128xf32>
    %26 = vector.extract_strided_slice %5 {offsets = [104, 0], sizes = [8, 128], strides = [1, 1]} : vector<192x128xf32> to vector<8x128xf32>
    %27 = vector.extract_strided_slice %5 {offsets = [112, 0], sizes = [8, 128], strides = [1, 1]} : vector<192x128xf32> to vector<8x128xf32>
    %28 = vector.extract_strided_slice %5 {offsets = [120, 0], sizes = [8, 128], strides = [1, 1]} : vector<192x128xf32> to vector<8x128xf32>
    %29 = vector.extract_strided_slice %5 {offsets = [128, 0], sizes = [8, 128], strides = [1, 1]} : vector<192x128xf32> to vector<8x128xf32>
    %30 = vector.extract_strided_slice %5 {offsets = [136, 0], sizes = [8, 128], strides = [1, 1]} : vector<192x128xf32> to vector<8x128xf32>
    %31 = vector.extract_strided_slice %5 {offsets = [144, 0], sizes = [8, 128], strides = [1, 1]} : vector<192x128xf32> to vector<8x128xf32>
    %32 = vector.extract_strided_slice %5 {offsets = [152, 0], sizes = [8, 128], strides = [1, 1]} : vector<192x128xf32> to vector<8x128xf32>
    %33 = vector.extract_strided_slice %5 {offsets = [160, 0], sizes = [8, 128], strides = [1, 1]} : vector<192x128xf32> to vector<8x128xf32>
    %34 = vector.extract_strided_slice %5 {offsets = [168, 0], sizes = [8, 128], strides = [1, 1]} : vector<192x128xf32> to vector<8x128xf32>
    %35 = vector.extract_strided_slice %5 {offsets = [176, 0], sizes = [8, 128], strides = [1, 1]} : vector<192x128xf32> to vector<8x128xf32>
    %36 = vector.extract_strided_slice %5 {offsets = [184, 0], sizes = [8, 128], strides = [1, 1]} : vector<192x128xf32> to vector<8x128xf32>
    %37 = arith.mulf %11, %21 : vector<8x128xf32>
    %38 = arith.mulf %14, %22 : vector<8x128xf32>
    %39 = arith.addf %37, %38 : vector<8x128xf32>
    %40 = arith.mulf %11, %23 : vector<8x128xf32>
    %41 = arith.mulf %14, %24 : vector<8x128xf32>
    %42 = arith.addf %40, %41 : vector<8x128xf32>
    %43 = arith.mulf %11, %25 : vector<8x128xf32>
    %44 = arith.mulf %14, %26 : vector<8x128xf32>
    %45 = arith.addf %43, %44 : vector<8x128xf32>
    %46 = arith.mulf %11, %27 : vector<8x128xf32>
    %47 = arith.mulf %14, %28 : vector<8x128xf32>
    %48 = arith.addf %46, %47 : vector<8x128xf32>
    %49 = arith.maximumf %39, %42 : vector<8x128xf32>
    %50 = arith.maximumf %45, %48 : vector<8x128xf32>
    %51 = arith.maximumf %49, %50 : vector<8x128xf32>
    %52 = arith.subf %39, %51 : vector<8x128xf32>
    %53 = math.exp %52 : vector<8x128xf32>
    %54 = arith.subf %42, %51 : vector<8x128xf32>
    %55 = math.exp %54 : vector<8x128xf32>
    %56 = arith.subf %45, %51 : vector<8x128xf32>
    %57 = math.exp %56 : vector<8x128xf32>
    %58 = arith.subf %48, %51 : vector<8x128xf32>
    %59 = math.exp %58 : vector<8x128xf32>
    %60 = arith.addf %53, %55 : vector<8x128xf32>
    %61 = arith.addf %60, %57 : vector<8x128xf32>
    %62 = arith.addf %61, %59 : vector<8x128xf32>
    %63 = tpu.reciprocal %62 {approx = true} : vector<8x128xf32> -> vector<8x128xf32>
    %64 = arith.mulf %53, %63 : vector<8x128xf32>
    %65 = arith.mulf %55, %63 : vector<8x128xf32>
    %66 = arith.mulf %57, %63 : vector<8x128xf32>
    %67 = arith.mulf %59, %63 : vector<8x128xf32>
    %68 = arith.mulf %64, %29 : vector<8x128xf32>
    %69 = arith.mulf %65, %31 : vector<8x128xf32>
    %70 = arith.addf %68, %69 : vector<8x128xf32>
    %71 = arith.mulf %66, %33 : vector<8x128xf32>
    %72 = arith.addf %70, %71 : vector<8x128xf32>
    %73 = arith.mulf %67, %35 : vector<8x128xf32>
    %74 = arith.addf %72, %73 : vector<8x128xf32>
    %75 = arith.mulf %64, %30 : vector<8x128xf32>
    %76 = arith.mulf %65, %32 : vector<8x128xf32>
    %77 = arith.addf %75, %76 : vector<8x128xf32>
    %78 = arith.mulf %66, %34 : vector<8x128xf32>
    %79 = arith.addf %77, %78 : vector<8x128xf32>
    %80 = arith.mulf %67, %36 : vector<8x128xf32>
    %81 = arith.addf %79, %80 : vector<8x128xf32>
    %c64_i32_5 = arith.constant 64 : i32
    %82 = tpu.dynamic_rotate %81 by %c64_i32_5 dim 1 : vector<8x128xf32>, i32 -> vector<8x128xf32>
    %83 = arith.select %8, %74, %82 : vector<8x128xi1>, vector<8x128xf32>
    %c64_i32_6 = arith.constant 64 : i32
    %84 = tpu.dynamic_rotate %74 by %c64_i32_6 dim 1 : vector<8x128xf32>, i32 -> vector<8x128xf32>
    %85 = arith.select %8, %84, %81 : vector<8x128xi1>, vector<8x128xf32>
    %86 = arith.mulf %17, %21 : vector<8x128xf32>
    %87 = arith.mulf %20, %22 : vector<8x128xf32>
    %88 = arith.addf %86, %87 : vector<8x128xf32>
    %89 = arith.mulf %17, %23 : vector<8x128xf32>
    %90 = arith.mulf %20, %24 : vector<8x128xf32>
    %91 = arith.addf %89, %90 : vector<8x128xf32>
    %92 = arith.mulf %17, %25 : vector<8x128xf32>
    %93 = arith.mulf %20, %26 : vector<8x128xf32>
    %94 = arith.addf %92, %93 : vector<8x128xf32>
    %95 = arith.mulf %17, %27 : vector<8x128xf32>
    %96 = arith.mulf %20, %28 : vector<8x128xf32>
    %97 = arith.addf %95, %96 : vector<8x128xf32>
    %98 = arith.maximumf %88, %91 : vector<8x128xf32>
    %99 = arith.maximumf %94, %97 : vector<8x128xf32>
    %100 = arith.maximumf %98, %99 : vector<8x128xf32>
    %101 = arith.subf %88, %100 : vector<8x128xf32>
    %102 = math.exp %101 : vector<8x128xf32>
    %103 = arith.subf %91, %100 : vector<8x128xf32>
    %104 = math.exp %103 : vector<8x128xf32>
    %105 = arith.subf %94, %100 : vector<8x128xf32>
    %106 = math.exp %105 : vector<8x128xf32>
    %107 = arith.subf %97, %100 : vector<8x128xf32>
    %108 = math.exp %107 : vector<8x128xf32>
    %109 = arith.addf %102, %104 : vector<8x128xf32>
    %110 = arith.addf %109, %106 : vector<8x128xf32>
    %111 = arith.addf %110, %108 : vector<8x128xf32>
    %112 = tpu.reciprocal %111 {approx = true} : vector<8x128xf32> -> vector<8x128xf32>
    %113 = arith.mulf %102, %112 : vector<8x128xf32>
    %114 = arith.mulf %104, %112 : vector<8x128xf32>
    %115 = arith.mulf %106, %112 : vector<8x128xf32>
    %116 = arith.mulf %108, %112 : vector<8x128xf32>
    %117 = arith.mulf %113, %29 : vector<8x128xf32>
    %118 = arith.mulf %114, %31 : vector<8x128xf32>
    %119 = arith.addf %117, %118 : vector<8x128xf32>
    %120 = arith.mulf %115, %33 : vector<8x128xf32>
    %121 = arith.addf %119, %120 : vector<8x128xf32>
    %122 = arith.mulf %116, %35 : vector<8x128xf32>
    %123 = arith.addf %121, %122 : vector<8x128xf32>
    %124 = arith.mulf %113, %30 : vector<8x128xf32>
    %125 = arith.mulf %114, %32 : vector<8x128xf32>
    %126 = arith.addf %124, %125 : vector<8x128xf32>
    %127 = arith.mulf %115, %34 : vector<8x128xf32>
    %128 = arith.addf %126, %127 : vector<8x128xf32>
    %129 = arith.mulf %116, %36 : vector<8x128xf32>
    %130 = arith.addf %128, %129 : vector<8x128xf32>
    %c64_i32_7 = arith.constant 64 : i32
    %131 = tpu.dynamic_rotate %130 by %c64_i32_7 dim 1 : vector<8x128xf32>, i32 -> vector<8x128xf32>
    %132 = arith.select %8, %123, %131 : vector<8x128xi1>, vector<8x128xf32>
    %c64_i32_8 = arith.constant 64 : i32
    %133 = tpu.dynamic_rotate %123 by %c64_i32_8 dim 1 : vector<8x128xf32>, i32 -> vector<8x128xf32>
    %134 = arith.select %8, %133, %130 : vector<8x128xi1>, vector<8x128xf32>
    %135 = tpu.concatenate %83, %85, %132, %134 in 0 : vector<8x128xf32>, vector<8x128xf32>, vector<8x128xf32>, vector<8x128xf32> -> vector<32x128xf32>
    %136 = arith.truncf %135 : vector<32x128xf32> to vector<32x128xbf16>
    %c0_9 = arith.constant 0 : index
    %c0_10 = arith.constant 0 : index
    %137 = vector.load %arg4[%c0_9, %c0_10] : memref<128x128xbf16, #tpu.memory_space<vmem>>, vector<128x128xbf16>
    %cst_11 = arith.constant dense<0.000000e+00> : vector<32x128xf32>
    %138 = tpu.matmul %136, %137, %cst_11 {dimension_numbers = #tpu.dot_dimension_numbers<[1], [0], [0], [1], [0, 0, 1, 1], [], []>} : vector<32x128xbf16>, vector<128x128xbf16>, vector<32x128xf32> -> vector<32x128xf32>
    %c0_12 = arith.constant 0 : index
    %c0_13 = arith.constant 0 : index
    %139 = vector.load %arg5[%c0_12, %c0_13] : memref<1x128xf32, #tpu.memory_space<vmem>>, vector<1x128xf32>
    %140 = vector.broadcast %139 : vector<1x128xf32> to vector<32x128xf32>
    %141 = arith.addf %138, %140 : vector<32x128xf32>
    %c0_14 = arith.constant 0 : index
    %c0_15 = arith.constant 0 : index
    %142 = vector.load %arg6[%c0_14, %c0_15] : memref<32x128xf32, #tpu.memory_space<vmem>>, vector<32x128xf32>
    tpu.vector_store %arg6[%c0_14, %c0_15], %141 {strides = array<i32>} : memref<32x128xf32, #tpu.memory_space<vmem>>, vector<32x128xf32>,
    return
  }
  func.func @transform_0(%arg0: i32) -> (i32, i32) {
    %c0_i32 = arith.constant 0 : i32
    %c0_i32_0 = arith.constant 0 : i32
    %c0_i32_1 = arith.constant 0 : i32
    return %c0_i32, %c0_i32_0 : i32, i32
  }
  func.func @transform_1(%arg0: i32) -> (i32, i32) {
    %c0_i32 = arith.constant 0 : i32
    %c0_i32_0 = arith.constant 0 : i32
    %c0_i32_1 = arith.constant 0 : i32
    return %c0_i32, %c0_i32_0 : i32, i32
  }
  func.func @transform_2(%arg0: i32) -> (i32, i32) {
    %c0_i32 = arith.constant 0 : i32
    %c0_i32_0 = arith.constant 0 : i32
    %c0_i32_1 = arith.constant 0 : i32
    return %c0_i32, %c0_i32_0 : i32, i32
  }
  func.func @transform_3(%arg0: i32) -> (i32, i32) {
    %c0_i32 = arith.constant 0 : i32
    %c0_i32_0 = arith.constant 0 : i32
    %c0_i32_1 = arith.constant 0 : i32
    return %c0_i32, %c0_i32_0 : i32, i32
  }
  func.func @transform_4(%arg0: i32) -> (i32, i32) {
    %c0_i32 = arith.constant 0 : i32
    %c0_i32_0 = arith.constant 0 : i32
    %c0_i32_1 = arith.constant 0 : i32
    return %c0_i32, %c0_i32_0 : i32, i32
  }
  func.func @transform_5(%arg0: i32) -> (i32, i32) {
    %c0_i32 = arith.constant 0 : i32
    %c0_i32_0 = arith.constant 0 : i32
    %c0_i32_1 = arith.constant 0 : i32
    return %c0_i32, %c0_i32_0 : i32, i32
  }
}

</mosaic_0001>

<llo_original>
// kernel: mul.4
$region0: #{mul.4}
  %s0 = inlined_call_operand.vmem [shape: f32[8,4,3,3], index: 0, kind: input, shape index: {}]
  %s1 = inlined_call_operand.vmem [shape: f32[8,36], index: 1, kind: output, shape index: {}]
  $region1: #{mul.4} parent=0
    #allocation0 [shape = 'u8[49152]{0}', space=vmem, size = 0xc000, scoped, tag = 'scoped mem for input reshape']
    %s3 = sshll.u32 1, 4
    %s4 = ssub.s32 %s3, 1
    %s5 = smul.addr 4, 11
    %s6 = scalar_lea.vmem %s0, %s5
    %v7 = vld [vmem:[%s6] sm:%s4]
    %s8 = scalar_lea.vmem [#allocation0], 88
    %9 = vst [vmem:[%s8] sm:%s4] %v7
    %s10 = smul.addr 4, 10
    %s11 = scalar_lea.vmem %s0, %s10
    %v12 = vld [vmem:[%s11] sm:%s4]
    %s13 = scalar_lea.vmem [#allocation0], 80
    %14 = vst [vmem:[%s13] sm:%s4] %v12
    %s15 = smul.addr 4, 9
    %s16 = scalar_lea.vmem %s0, %s15
    %v17 = vld [vmem:[%s16] sm:%s4]
    %s18 = scalar_lea.vmem [#allocation0], 72
    %19 = vst [vmem:[%s18] sm:%s4] %v17
    %s20 = smul.addr 4, 8
    %s21 = scalar_lea.vmem %s0, %s20
    %v22 = vld [vmem:[%s21] sm:%s4]
    %s23 = scalar_lea.vmem [#allocation0], 64
    %24 = vst [vmem:[%s23] sm:%s4] %v22
    %s25 = smul.addr 4, 7
    %s26 = scalar_lea.vmem %s0, %s25
    %v27 = vld [vmem:[%s26] sm:%s4]
    %s28 = scalar_lea.vmem [#allocation0], 56
    %29 = vst [vmem:[%s28] sm:%s4] %v27
    %s30 = smul.addr 4, 6
    %s31 = scalar_lea.vmem %s0, %s30
    %v32 = vld [vmem:[%s31] sm:%s4]
    %s33 = scalar_lea.vmem [#allocation0], 48
    %34 = vst [vmem:[%s33] sm:%s4] %v32
    %s35 = smul.addr 4, 5
    %s36 = scalar_lea.vmem %s0, %s35
    %v37 = vld [vmem:[%s36] sm:%s4]
    %s38 = scalar_lea.vmem [#allocation0], 40
    %39 = vst [vmem:[%s38] sm:%s4] %v37
    %s40 = smul.addr 4, 4
    %s41 = scalar_lea.vmem %s0, %s40
    %v42 = vld [vmem:[%s41] sm:%s4]
    %s43 = scalar_lea.vmem [#allocation0], 32
    %44 = vst [vmem:[%s43] sm:%s4] %v42
    %s45 = smul.addr 4, 3
    %s46 = scalar_lea.vmem %s0, %s45
    %v47 = vld [vmem:[%s46] sm:%s4]
    %s48 = scalar_lea.vmem [#allocation0], 24
    %49 = vst [vmem:[%s48] sm:%s4] %v47
    %s50 = smul.addr 4, 2
    %s51 = scalar_lea.vmem %s0, %s50
    %v52 = vld [vmem:[%s51] sm:%s4]
    %s53 = scalar_lea.vmem [#allocation0], 16
    %54 = vst [vmem:[%s53] sm:%s4] %v52
    %s55 = scalar_lea.vmem %s0, 4
    %v56 = vld [vmem:[%s55] sm:%s4]
    %s57 = scalar_lea.vmem [#allocation0], 8
    %58 = vst [vmem:[%s57] sm:%s4] %v56
    %v59 = vld [vmem:[%s0] sm:%s4]
    %60 = vst [vmem:[#allocation0] sm:%s4] %v59
    %v61 = vld [vmem:[#allocation0] sm:$0x7]
    %vm62 = vcmask 64512
    %63 = vst.msk [vmem:[%s1] sm:$0x7] %vm62, %v61
    %s64 = scalar_lea.vmem [#allocation0], 8
    %v65 = vld [vmem:[%s64] sm:$0x7]
    %vm66 = vcmask 64512
    %s67 = scalar_lea.vmem %s1, 3
    %68 = vst.msk [vmem:[%s67] sm:$0x7] %vm66, %v65
    %s69 = scalar_lea.vmem [#allocation0], 16
    %v70 = vld [vmem:[%s69] sm:$0x7]
    %vm71 = vcmask 64512
    %s72 = scalar_lea.vmem %s1, 6
    %73 = vst.msk [vmem:[%s72] sm:$0x7] %vm71, %v70
    %s74 = scalar_lea.vmem [#allocation0], 24
    %v75 = vld [vmem:[%s74] sm:$0x7]
    %vm76 = vcmask 64512
    %s77 = scalar_lea.vmem %s1, 9
    %78 = vst.msk [vmem:[%s77] sm:$0x7] %vm76, %v75
    %s79 = scalar_lea.vmem [#allocation0], 32
    %v80 = vld [vmem:[%s79] sm:$0x7]
    %vm81 = vcmask 64512
    %s82 = scalar_lea.vmem %s1, 12
    %83 = vst.msk [vmem:[%s82] sm:$0x7] %vm81, %v80
    %s84 = scalar_lea.vmem [#allocation0], 40
    %v85 = vld [vmem:[%s84] sm:$0x7]
    %vm86 = vcmask 64512
    %s87 = scalar_lea.vmem %s1, 15
    %88 = vst.msk [vmem:[%s87] sm:$0x7] %vm86, %v85
    %s89 = scalar_lea.vmem [#allocation0], 48
    %v90 = vld [vmem:[%s89] sm:$0x7]
    %vm91 = vcmask 64512
    %s92 = scalar_lea.vmem %s1, 18
    %93 = vst.msk [vmem:[%s92] sm:$0x7] %vm91, %v90
    %s94 = scalar_lea.vmem [#allocation0], 56
    %v95 = vld [vmem:[%s94] sm:$0x7]
    %vm96 = vcmask 64512
    %s97 = scalar_lea.vmem %s1, 21
    %98 = vst.msk [vmem:[%s97] sm:$0x7] %vm96, %v95
    %s99 = scalar_lea.vmem [#allocation0], 64
    %v100 = vld [vmem:[%s99] sm:$0x7]
    %vm101 = vcmask 64512
    %s102 = scalar_lea.vmem %s1, 24
    %103 = vst.msk [vmem:[%s102] sm:$0x7] %vm101, %v100
    %s104 = scalar_lea.vmem [#allocation0], 72
    %v105 = vld [vmem:[%s104] sm:$0x7]
    %vm106 = vcmask 64512
    %s107 = scalar_lea.vmem %s1, 27
    %108 = vst.msk [vmem:[%s107] sm:$0x7] %vm106, %v105
    %s109 = scalar_lea.vmem [#allocation0], 80
    %v110 = vld [vmem:[%s109] sm:$0x7]
    %vm111 = vcmask 64512
    %s112 = scalar_lea.vmem %s1, 30
    %113 = vst.msk [vmem:[%s112] sm:$0x7] %vm111, %v110
    %s114 = scalar_lea.vmem [#allocation0], 88
    %v115 = vld [vmem:[%s114] sm:$0x7]
    %vm116 = vcmask 64512
    %s117 = scalar_lea.vmem %s1, 33
    %118 = vst.msk [vmem:[%s117] sm:$0x7] %vm116, %v115

// kernel: tile.8
$region0: #{tile.8}
  #allocation0 [shape = 's32[1]{0}', space=sflag, size = 0x4, scoped, tag = 'scoped memory for tile.8']
  %s0 = inlined_call_operand.vmem [shape: f32[8], index: 0, kind: input, shape index: {}]
  %s1 = inlined_call_operand.vmem [shape: f32[16,8], index: 1, kind: output, shape index: {}]
  // Predicated region
  $region2: #{tile.8} parent=0 // pred_check
    _
  $region3: #{tile.8} parent=0 // pred_check_branch
    %3 = sbr.rel (0) target = $region5
  $region4: #{tile.8} parent=0 // pred_region
    _
  $region5: #{tile.8} parent=0 // pred_fallthru
    _
  %v4 = vld [vmem:[%s0] ss:$0 sm:$0xff]
  %5 = vst [vmem:[%s1] sm:$0xff] %v4
  %s6 = scalar_lea.vmem %s1, 8
  %7 = vst [vmem:[%s6] sm:$0xff] %v4

// kernel: tile.9
$region0: #{tile.9}
  %s0 = inlined_call_operand.vmem [shape: f32[16,8], index: 0, kind: input, shape index: {}]
  %s1 = inlined_call_operand.vmem [shape: f32[1,128], index: 1, kind: output, shape index: {}]
  $region1: #{tile.9} parent=0
    #allocation0 [shape = 'u8[4096]{0}', space=vmem, size = 0x1000, scoped, tag = 'scoped mem for output reshape']
    %v2 = vld [vmem:[%s0] sm:$0x1]
    %vm3 = vcmask 64512
    %4 = vst.msk [vmem:[#allocation0] sm:$0x1] %vm3, %v2
    %s5 = scalar_lea.vmem %s0, 15
    %v6 = vld [vmem:[%s5] sm:$0x1]
    %7 = vrot.lane.b32.xlu0 %v6, 120
    %v8 = vpop.permute.xlu0 %7
    %vm9 = vcmask 1048512
    %10 = vst.msk [vmem:[#allocation0] sm:$0x1] %vm9, %v8
    %s11 = scalar_lea.vmem %s0, 14
    %v12 = vld [vmem:[%s11] sm:$0x1]
    %13 = vrot.lane.b32.xlu0 %v12, 112
    %v14 = vpop.permute.xlu0 %13
    %vm15 = vcmask 982912
    %16 = vst.msk [vmem:[#allocation0] sm:$0x1] %vm15, %v14
    %s17 = scalar_lea.vmem %s0, 13
    %v18 = vld [vmem:[%s17] sm:$0x1]
    %19 = vrot.lane.b32.xlu0 %v18, 104
    %v20 = vpop.permute.xlu0 %19
    %vm21 = vcmask 917312
    %22 = vst.msk [vmem:[#allocation0] sm:$0x1] %vm21, %v20
    %s23 = scalar_lea.vmem %s0, 12
    %v24 = vld [vmem:[%s23] sm:$0x1]
    %25 = vrot.lane.b32.xlu0 %v24, 96
    %v26 = vpop.permute.xlu0 %25
    %vm27 = vcmask 851712
    %28 = vst.msk [vmem:[#allocation0] sm:$0x1] %vm27, %v26
    %s29 = scalar_lea.vmem %s0, 11
    %v30 = vld [vmem:[%s29] sm:$0x1]
    %31 = vrot.lane.b32.xlu0 %v30, 88
    %v32 = vpop.permute.xlu0 %31
    %vm33 = vcmask 786112
    %34 = vst.msk [vmem:[#allocation0] sm:$0x1] %vm33, %v32
    %s35 = scalar_lea.vmem %s0, 10
    %v36 = vld [vmem:[%s35] sm:$0x1]
    %37 = vrot.lane.b32.xlu0 %v36, 80
    %v38 = vpop.permute.xlu0 %37
    %vm39 = vcmask 720512
    %40 = vst.msk [vmem:[#allocation0] sm:$0x1] %vm39, %v38
    %s41 = scalar_lea.vmem %s0, 9
    %v42 = vld [vmem:[%s41] sm:$0x1]
    %43 = vrot.lane.b32.xlu0 %v42, 72
    %v44 = vpop.permute.xlu0 %43
    %vm45 = vcmask 654912
    %46 = vst.msk [vmem:[#allocation0] sm:$0x1] %vm45, %v44
    %s47 = scalar_lea.vmem %s0, 8
    %v48 = vld [vmem:[%s47] sm:$0x1]
    %49 = vrot.lane.b32.xlu0 %v48, 64
    %v50 = vpop.permute.xlu0 %49
    %vm51 = vcmask 589312
    %52 = vst.msk [vmem:[#allocation0] sm:$0x1] %vm51, %v50
    %s53 = scalar_lea.vmem %s0, 7
    %v54 = vld [vmem:[%s53] sm:$0x1]
    %55 = vrot.lane.b32.xlu0 %v54, 56
    %v56 = vpop.permute.xlu0 %55
    %vm57 = vcmask 523712
    %58 = vst.msk [vmem:[#allocation0] sm:$0x1] %vm57, %v56
    %s59 = scalar_lea.vmem %s0, 6
    %v60 = vld [vmem:[%s59] sm:$0x1]
    %61 = vrot.lane.b32.xlu0 %v60, 48
    %v62 = vpop.permute.xlu0 %61
    %vm63 = vcmask 458112
    %64 = vst.msk [vmem:[#allocation0] sm:$0x1] %vm63, %v62
    %s65 = scalar_lea.vmem %s0, 5
    %v66 = vld [vmem:[%s65] sm:$0x1]
    %67 = vrot.lane.b32.xlu0 %v66, 40
    %v68 = vpop.permute.xlu0 %67
    %vm69 = vcmask 392512
    %70 = vst.msk [vmem:[#allocation0] sm:$0x1] %vm69, %v68
    %s71 = scalar_lea.vmem %s0, 4
    %v72 = vld [vmem:[%s71] sm:$0x1]
    %73 = vrot.lane.b32.xlu0 %v72, 32
    %v74 = vpop.permute.xlu0 %73
    %vm75 = vcmask 326912
    %76 = vst.msk [vmem:[#allocation0] sm:$0x1] %vm75, %v74
    %s77 = scalar_lea.vmem %s0, 3
    %v78 = vld [vmem:[%s77] sm:$0x1]
    %79 = vrot.lane.b32.xlu0 %v78, 24
    %v80 = vpop.permute.xlu0 %79
    %vm81 = vcmask 261312
    %82 = vst.msk [vmem:[#allocation0] sm:$0x1] %vm81, %v80
    %s83 = scalar_lea.vmem %s0, 2
    %v84 = vld [vmem:[%s83] sm:$0x1]
    %85 = vrot.lane.b32.xlu0 %v84, 16
    %v86 = vpop.permute.xlu0 %85
    %vm87 = vcmask 195712
    %88 = vst.msk [vmem:[#allocation0] sm:$0x1] %vm87, %v86
    %s89 = scalar_lea.vmem %s0, 1
    %v90 = vld [vmem:[%s89] sm:$0x1]
    %91 = vrot.lane.b32.xlu0 %v90, 8
    %v92 = vpop.permute.xlu0 %91
    %vm93 = vcmask 130112
    %94 = vst.msk [vmem:[#allocation0] sm:$0x1] %vm93, %v92
    %s96 = sshll.u32 1, 1
    %s97 = ssub.s32 %s96, 1
    %v99 = vld [vmem:[#allocation0] sm:%s97]
    %s100 = sshll.u32 1, 1
    %s101 = ssub.s32 %s100, 1
    %102 = vst [vmem:[%s1] sm:%s101] %v99

// kernel: attention_guided_conv.1
$region0: #{attention_guided_conv.1}
  #allocation0 [shape = 'u32[]', space=smem, size = 0x4, offset = 0x4, fixed_abs, tag = 'smem constant byte address 0x4 - core index']
  #allocation1 [shape = 'u32[144,128]{1,0:T(1,128)}', space=vmem, size = 0x12000, scoped, tag = 'internal scratch']
  %s0 = inlined_call_operand.vmem [shape: bf16[288,128], index: 0, kind: input, shape index: {}]
  %s1 = inlined_call_operand.vmem [shape: bf16[192,288], index: 1, kind: input, shape index: {}]
  %s2 = inlined_call_operand.vmem [shape: f32[192,1], index: 2, kind: input, shape index: {}]
  %s3 = inlined_call_operand.vmem [shape: bf16[128,128], index: 3, kind: input, shape index: {}]
  %s4 = inlined_call_operand.vmem [shape: f32[1,128], index: 4, kind: input, shape index: {}]
  %s5 = inlined_call_operand.vmem [shape: f32[32,128], index: 5, kind: output, shape index: {}]
  %s6 = sld [smem:[#allocation0]]
  $region30: #{attention_guided_conv.1} parent=0
    _
  %s8 = ssub.s32 1, %s6
  %s9 = scalar_select 0, %s8, %s6
  // Predicated region
  $region2: #{attention_guided_conv.1} parent=0 // pred_check
    _
  $region3: #{attention_guided_conv.1} parent=0 // pred_check_branch
    %11 = sbr.rel (0) target = $region5
  $region4: #{attention_guided_conv.1} parent=0 // pred_region
    _
  $region5: #{attention_guided_conv.1} parent=0 // pred_fallthru
    _
  // Predicated region
  $region6: #{attention_guided_conv.1} parent=0 // pred_check
    _
  $region7: #{attention_guided_conv.1} parent=0 // pred_check_branch
    %13 = sbr.rel (0) target = $region9
  $region8: #{attention_guided_conv.1} parent=0 // pred_region
    _
  $region9: #{attention_guided_conv.1} parent=0 // pred_fallthru
    _
  // Predicated region
  $region10: #{attention_guided_conv.1} parent=0 // pred_check
    _
  $region11: #{attention_guided_conv.1} parent=0 // pred_check_branch
    %15 = sbr.rel (0) target = $region13
  $region12: #{attention_guided_conv.1} parent=0 // pred_region
    _
  $region13: #{attention_guided_conv.1} parent=0 // pred_fallthru
    _
  // Predicated region
  $region14: #{attention_guided_conv.1} parent=0 // pred_check
    _
  $region15: #{attention_guided_conv.1} parent=0 // pred_check_branch
    %17 = sbr.rel (0) target = $region17
  $region16: #{attention_guided_conv.1} parent=0 // pred_region
    _
  $region17: #{attention_guided_conv.1} parent=0 // pred_fallthru
    _
  // Predicated region
  $region18: #{attention_guided_conv.1} parent=0 // pred_check
    _
  $region19: #{attention_guided_conv.1} parent=0 // pred_check_branch
    %19 = sbr.rel (0) target = $region21
  $region20: #{attention_guided_conv.1} parent=0 // pred_region
    _
  $region21: #{attention_guided_conv.1} parent=0 // pred_fallthru
    _
  %v21 = vld [vmem:[%s1] sm:$0xff]
  %v22 = vld [vmem:[%s1 + $0x8] sm:$0xf]
  %v23 = vld [vmem:[%s1 + $0xc] sm:$0xff]
  %v24 = vld [vmem:[%s1 + $0x14] sm:$0xf]
  %v25 = vld [vmem:[%s1 + $0x18] sm:$0xff]
  %v26 = vld [vmem:[%s1 + $0x20] sm:$0xf]
  %v27 = vld [vmem:[%s1 + $0x24] sm:$0xff]
  %v28 = vld [vmem:[%s1 + $0x2c] sm:$0xf]
  %v29 = vld [vmem:[%s1 + $0x30] sm:$0xff]
  %v30 = vld [vmem:[%s1 + $0x38] sm:$0xf]
  %v31 = vld [vmem:[%s1 + $0x3c] sm:$0xff]
  %v32 = vld [vmem:[%s1 + $0x44] sm:$0xf]
  %v33 = vld [vmem:[%s1 + $0x48] sm:$0xff]
  %v34 = vld [vmem:[%s1 + $0x50] sm:$0xf]
  %v35 = vld [vmem:[%s1 + $0x54] sm:$0xff]
  %v36 = vld [vmem:[%s1 + $0x5c] sm:$0xf]
  %v37 = vld [vmem:[%s1 + $0x60] sm:$0xff]
  %v38 = vld [vmem:[%s1 + $0x68] sm:$0xf]
  %v39 = vld [vmem:[%s1 + $0x6c] sm:$0xff]
  %v40 = vld [vmem:[%s1 + $0x74] sm:$0xf]
  %v41 = vld [vmem:[%s1 + $0x78] sm:$0xff]
  %v42 = vld [vmem:[%s1 + $0x80] sm:$0xf]
  %v43 = vld [vmem:[%s1 + $0x84] sm:$0xff]
  %v44 = vld [vmem:[%s1 + $0x8c] sm:$0xf]
  %v45 = vld [vmem:[%s1 + $0x90] sm:$0xff]
  %v46 = vld [vmem:[%s1 + $0x98] sm:$0xf]
  %v47 = vld [vmem:[%s1 + $0x9c] sm:$0xff]
  %v48 = vld [vmem:[%s1 + $0xa4] sm:$0xf]
  %v49 = vld [vmem:[%s1 + $0xa8] sm:$0xff]
  %v50 = vld [vmem:[%s1 + $0xb0] sm:$0xf]
  %v51 = vld [vmem:[%s1 + $0xb4] sm:$0xff]
  %v52 = vld [vmem:[%s1 + $0xbc] sm:$0xf]
  %v53 = vld [vmem:[%s1 + $0xc0] sm:$0xff]
  %v54 = vld [vmem:[%s1 + $0xc8] sm:$0xf]
  %v55 = vld [vmem:[%s1 + $0xcc] sm:$0xff]
  %v56 = vld [vmem:[%s1 + $0xd4] sm:$0xf]
  %v57 = vld [vmem:[%s1 + $0xd8] sm:$0xff]
  %v58 = vld [vmem:[%s1 + $0xe0] sm:$0xf]
  %v59 = vld [vmem:[%s1 + $0xe4] sm:$0xff]
  %v60 = vld [vmem:[%s1 + $0xec] sm:$0xf]
  %v61 = vld [vmem:[%s1 + $0xf0] sm:$0xff]
  %v62 = vld [vmem:[%s1 + $0xf8] sm:$0xf]
  %v63 = vld [vmem:[%s1 + $0xfc] sm:$0xff]
  %v64 = vld [vmem:[%s1 + $0x104] sm:$0xf]
  %v65 = vld [vmem:[%s1 + $0x108] sm:$0xff]
  %v66 = vld [vmem:[%s1 + $0x110] sm:$0xf]
  %v67 = vld [vmem:[%s1 + $0x114] sm:$0xff]
  %v68 = vld [vmem:[%s1 + $0x11c] sm:$0xf]
  %v69 = vld [vmem:[%s0] sm:$0xf]
  %v70 = vld [vmem:[%s0 + $0x4] sm:$0xf]
  %v71 = vld [vmem:[%s0 + $0x8] sm:$0xf]
  %v72 = vld [vmem:[%s0 + $0xc] sm:$0xf]
  %v73 = vld [vmem:[%s0 + $0x10] sm:$0xf]
  %v74 = vld [vmem:[%s0 + $0x14] sm:$0xf]
  %v75 = vld [vmem:[%s0 + $0x18] sm:$0xf]
  %v76 = vld [vmem:[%s0 + $0x1c] sm:$0xf]
  %v77 = vld [vmem:[%s0 + $0x20] sm:$0xf]
  %v78 = vld [vmem:[%s0 + $0x24] sm:$0xf]
  %v79 = vld [vmem:[%s0 + $0x28] sm:$0xf]
  %v80 = vld [vmem:[%s0 + $0x2c] sm:$0xf]
  %v81 = vld [vmem:[%s0 + $0x30] sm:$0xf]
  %v82 = vld [vmem:[%s0 + $0x34] sm:$0xf]
  %v83 = vld [vmem:[%s0 + $0x38] sm:$0xf]
  %v84 = vld [vmem:[%s0 + $0x3c] sm:$0xf]
  %v85 = vld [vmem:[%s0 + $0x40] sm:$0xf]
  %v86 = vld [vmem:[%s0 + $0x44] sm:$0xf]
  %v87 = vld [vmem:[%s0 + $0x48] sm:$0xf]
  %v88 = vld [vmem:[%s0 + $0x4c] sm:$0xf]
  %v89 = vld [vmem:[%s0 + $0x50] sm:$0xf]
  %v90 = vld [vmem:[%s0 + $0x54] sm:$0xf]
  %v91 = vld [vmem:[%s0 + $0x58] sm:$0xf]
  %v92 = vld [vmem:[%s0 + $0x5c] sm:$0xf]
  %v93 = vld [vmem:[%s0 + $0x60] sm:$0xf]
  %v94 = vld [vmem:[%s0 + $0x64] sm:$0xf]
  %v95 = vld [vmem:[%s0 + $0x68] sm:$0xf]
  %v96 = vld [vmem:[%s0 + $0x6c] sm:$0xf]
  %v97 = vld [vmem:[%s0 + $0x70] sm:$0xf]
  %v98 = vld [vmem:[%s0 + $0x74] sm:$0xf]
  %v99 = vld [vmem:[%s0 + $0x78] sm:$0xf]
  %v100 = vld [vmem:[%s0 + $0x7c] sm:$0xf]
  %v101 = vld [vmem:[%s0 + $0x80] sm:$0xf]
  %v102 = vld [vmem:[%s0 + $0x84] sm:$0xf]
  %v103 = vld [vmem:[%s0 + $0x88] sm:$0xf]
  %v104 = vld [vmem:[%s0 + $0x8c] sm:$0xf]
  %v105 = vld [vmem:[%s2] sm:$0xff]
  %v106 = vld [vmem:[%s2 + $0x8] sm:$0xff]
  %v107 = vld [vmem:[%s2 + $0x10] sm:$0xff]
  %v108 = vld [vmem:[%s2 + $0x18] sm:$0xff]
  %v109 = vld [vmem:[%s2 + $0x20] sm:$0xff]
  %v110 = vld [vmem:[%s2 + $0x28] sm:$0xff]
  %v111 = vld [vmem:[%s2 + $0x30] sm:$0xff]
  %v112 = vld [vmem:[%s2 + $0x38] sm:$0xff]
  %v113 = vld [vmem:[%s2 + $0x40] sm:$0xff]
  %v114 = vld [vmem:[%s2 + $0x48] sm:$0xff]
  %v115 = vld [vmem:[%s2 + $0x50] sm:$0xff]
  %v116 = vld [vmem:[%s2 + $0x58] sm:$0xff]
  %v117 = vld [vmem:[%s2 + $0x60] sm:$0xff]
  %v118 = vld [vmem:[%s2 + $0x68] sm:$0xff]
  %v119 = vld [vmem:[%s2 + $0x70] sm:$0xff]
  %v120 = vld [vmem:[%s2 + $0x78] sm:$0xff]
  %v121 = vld [vmem:[%s2 + $0x80] sm:$0xff]
  %v122 = vld [vmem:[%s2 + $0x88] sm:$0xff]
  %v123 = vld [vmem:[%s2 + $0x90] sm:$0xff]
  %v124 = vld [vmem:[%s2 + $0x98] sm:$0xff]
  %v125 = vld [vmem:[%s2 + $0xa0] sm:$0xff]
  %v126 = vld [vmem:[%s2 + $0xa8] sm:$0xff]
  %v127 = vld [vmem:[%s2 + $0xb0] sm:$0xff]
  %v128 = vld [vmem:[%s2 + $0xb8] sm:$0xff]
  %130 = vset.pattern.permute.xlu0 0
  %131 = vperm.xlu0 %130, %v105
  %v132 = vpop.permute.xlu0 %131
  %135 = vset.pattern.permute.xlu0 0
  %136 = vperm.xlu0 %135, %v106
  %v137 = vpop.permute.xlu0 %136
  %140 = vset.pattern.permute.xlu0 0
  %141 = vperm.xlu0 %140, %v107
  %v142 = vpop.permute.xlu0 %141
  %145 = vset.pattern.permute.xlu0 0
  %146 = vperm.xlu0 %145, %v108
  %v147 = vpop.permute.xlu0 %146
  %150 = vset.pattern.permute.xlu0 0
  %151 = vperm.xlu0 %150, %v109
  %v152 = vpop.permute.xlu0 %151
  %155 = vset.pattern.permute.xlu0 0
  %156 = vperm.xlu0 %155, %v110
  %v157 = vpop.permute.xlu0 %156
  %160 = vset.pattern.permute.xlu0 0
  %161 = vperm.xlu0 %160, %v111
  %v162 = vpop.permute.xlu0 %161
  %165 = vset.pattern.permute.xlu0 0
  %166 = vperm.xlu0 %165, %v112
  %v167 = vpop.permute.xlu0 %166
  %170 = vset.pattern.permute.xlu0 0
  %171 = vperm.xlu0 %170, %v113
  %v172 = vpop.permute.xlu0 %171
  %175 = vset.pattern.permute.xlu0 0
  %176 = vperm.xlu0 %175, %v114
  %v177 = vpop.permute.xlu0 %176
  %180 = vset.pattern.permute.xlu0 0
  %181 = vperm.xlu0 %180, %v115
  %v182 = vpop.permute.xlu0 %181
  %185 = vset.pattern.permute.xlu0 0
  %186 = vperm.xlu0 %185, %v116
  %v187 = vpop.permute.xlu0 %186
  %190 = vset.pattern.permute.xlu0 0
  %191 = vperm.xlu0 %190, %v117
  %v192 = vpop.permute.xlu0 %191
  %195 = vset.pattern.permute.xlu0 0
  %196 = vperm.xlu0 %195, %v118
  %v197 = vpop.permute.xlu0 %196
  %200 = vset.pattern.permute.xlu0 0
  %201 = vperm.xlu0 %200, %v119
  %v202 = vpop.permute.xlu0 %201
  %205 = vset.pattern.permute.xlu0 0
  %206 = vperm.xlu0 %205, %v120
  %v207 = vpop.permute.xlu0 %206
  %210 = vset.pattern.permute.xlu0 0
  %211 = vperm.xlu0 %210, %v121
  %v212 = vpop.permute.xlu0 %211
  %215 = vset.pattern.permute.xlu0 0
  %216 = vperm.xlu0 %215, %v122
  %v217 = vpop.permute.xlu0 %216
  %220 = vset.pattern.permute.xlu0 0
  %221 = vperm.xlu0 %220, %v123
  %v222 = vpop.permute.xlu0 %221
  %225 = vset.pattern.permute.xlu0 0
  %226 = vperm.xlu0 %225, %v124
  %v227 = vpop.permute.xlu0 %226
  %230 = vset.pattern.permute.xlu0 0
  %231 = vperm.xlu0 %230, %v125
  %v232 = vpop.permute.xlu0 %231
  %235 = vset.pattern.permute.xlu0 0
  %236 = vperm.xlu0 %235, %v126
  %v237 = vpop.permute.xlu0 %236
  %240 = vset.pattern.permute.xlu0 0
  %241 = vperm.xlu0 %240, %v127
  %v242 = vpop.permute.xlu0 %241
  %245 = vset.pattern.permute.xlu0 0
  %246 = vperm.xlu0 %245, %v128
  %v247 = vpop.permute.xlu0 %246
  %v297 = vunpack.c.l.b16 %v21
  %v298 = vunpack.c.h.b16 %v21
  %v299 = vunpack.c.l.b16 %v22
  %v300 = vunpack.c.l.b16 %v23
  %v301 = vunpack.c.h.b16 %v23
  %v302 = vunpack.c.l.b16 %v24
  %v303 = vunpack.c.l.b16 %v25
  %v304 = vunpack.c.h.b16 %v25
  %v305 = vunpack.c.l.b16 %v26
  %v306 = vunpack.c.l.b16 %v27
  %v307 = vunpack.c.h.b16 %v27
  %v308 = vunpack.c.l.b16 %v28
  %v309 = vunpack.c.l.b16 %v29
  %v310 = vunpack.c.h.b16 %v29
  %v311 = vunpack.c.l.b16 %v30
  %v312 = vunpack.c.l.b16 %v31
  %v313 = vunpack.c.h.b16 %v31
  %v314 = vunpack.c.l.b16 %v32
  %v315 = vunpack.c.l.b16 %v33
  %v316 = vunpack.c.h.b16 %v33
  %v317 = vunpack.c.l.b16 %v34
  %v318 = vunpack.c.l.b16 %v35
  %v319 = vunpack.c.h.b16 %v35
  %v320 = vunpack.c.l.b16 %v36
  %v321 = vunpack.c.l.b16 %v37
  %v322 = vunpack.c.h.b16 %v37
  %v323 = vunpack.c.l.b16 %v38
  %v324 = vunpack.c.l.b16 %v39
  %v325 = vunpack.c.h.b16 %v39
  %v326 = vunpack.c.l.b16 %v40
  %v327 = vunpack.c.l.b16 %v41
  %v328 = vunpack.c.h.b16 %v41
  %v329 = vunpack.c.l.b16 %v42
  %v330 = vunpack.c.l.b16 %v43
  %v331 = vunpack.c.h.b16 %v43
  %v332 = vunpack.c.l.b16 %v44
  %v333 = vunpack.c.l.b16 %v45
  %v334 = vunpack.c.h.b16 %v45
  %v335 = vunpack.c.l.b16 %v46
  %v336 = vunpack.c.l.b16 %v47
  %v337 = vunpack.c.h.b16 %v47
  %v338 = vunpack.c.l.b16 %v48
  %v339 = vunpack.c.l.b16 %v49
  %v340 = vunpack.c.h.b16 %v49
  %v341 = vunpack.c.l.b16 %v50
  %v342 = vunpack.c.l.b16 %v51
  %v343 = vunpack.c.h.b16 %v51
  %v344 = vunpack.c.l.b16 %v52
  %v345 = vunpack.c.l.b16 %v53
  %v346 = vunpack.c.h.b16 %v53
  %v347 = vunpack.c.l.b16 %v54
  %v348 = vunpack.c.l.b16 %v55
  %v349 = vunpack.c.h.b16 %v55
  %v350 = vunpack.c.l.b16 %v56
  %v351 = vunpack.c.l.b16 %v57
  %v352 = vunpack.c.h.b16 %v57
  %v353 = vunpack.c.l.b16 %v58
  %v354 = vunpack.c.l.b16 %v59
  %v355 = vunpack.c.h.b16 %v59
  %v356 = vunpack.c.l.b16 %v60
  %v357 = vunpack.c.l.b16 %v61
  %v358 = vunpack.c.h.b16 %v61
  %v359 = vunpack.c.l.b16 %v62
  %v360 = vunpack.c.l.b16 %v63
  %v361 = vunpack.c.h.b16 %v63
  %v362 = vunpack.c.l.b16 %v64
  %v363 = vunpack.c.l.b16 %v65
  %v364 = vunpack.c.h.b16 %v65
  %v365 = vunpack.c.l.b16 %v66
  %v366 = vunpack.c.l.b16 %v67
  %v367 = vunpack.c.h.b16 %v67
  %v368 = vunpack.c.l.b16 %v68
  %v369 = vpack.c.b16 %v300, %v297
  %v370 = vpack.c.b16 %v301, %v298
  %v371 = vpack.c.b16 %v302, %v299
  %v372 = vpack.c.b16 %v306, %v303
  %v373 = vpack.c.b16 %v307, %v304
  %v374 = vpack.c.b16 %v308, %v305
  %v375 = vpack.c.b16 %v312, %v309
  %v376 = vpack.c.b16 %v313, %v310
  %v377 = vpack.c.b16 %v314, %v311
  %v378 = vpack.c.b16 %v318, %v315
  %v379 = vpack.c.b16 %v319, %v316
  %v380 = vpack.c.b16 %v320, %v317
  %v381 = vpack.c.b16 %v324, %v321
  %v382 = vpack.c.b16 %v325, %v322
  %v383 = vpack.c.b16 %v326, %v323
  %v384 = vpack.c.b16 %v330, %v327
  %v385 = vpack.c.b16 %v331, %v328
  %v386 = vpack.c.b16 %v332, %v329
  %v387 = vpack.c.b16 %v336, %v333
  %v388 = vpack.c.b16 %v337, %v334
  %v389 = vpack.c.b16 %v338, %v335
  %v390 = vpack.c.b16 %v342, %v339
  %v391 = vpack.c.b16 %v343, %v340
  %v392 = vpack.c.b16 %v344, %v341
  %v393 = vpack.c.b16 %v348, %v345
  %v394 = vpack.c.b16 %v349, %v346
  %v395 = vpack.c.b16 %v350, %v347
  %v396 = vpack.c.b16 %v354, %v351
  %v397 = vpack.c.b16 %v355, %v352
  %v398 = vpack.c.b16 %v356, %v353
  %v399 = vpack.c.b16 %v360, %v357
  %v400 = vpack.c.b16 %v361, %v358
  %v401 = vpack.c.b16 %v362, %v359
  %v402 = vpack.c.b16 %v366, %v363
  %v403 = vpack.c.b16 %v367, %v364
  %v404 = vpack.c.b16 %v368, %v365
  %v465 = vunpack.c.l.b16 %v69
  %v466 = vunpack.c.l.b16 %v70
  %v467 = vunpack.c.l.b16 %v71
  %v468 = vunpack.c.l.b16 %v72
  %v469 = vunpack.c.l.b16 %v73
  %v470 = vunpack.c.l.b16 %v74
  %v471 = vunpack.c.l.b16 %v75
  %v472 = vunpack.c.l.b16 %v76
  %v473 = vunpack.c.l.b16 %v77
  %v474 = vunpack.c.l.b16 %v78
  %v475 = vunpack.c.l.b16 %v79
  %v476 = vunpack.c.l.b16 %v80
  %v477 = vunpack.c.l.b16 %v81
  %v478 = vunpack.c.l.b16 %v82
  %v479 = vunpack.c.l.b16 %v83
  %v480 = vunpack.c.l.b16 %v84
  %v481 = vunpack.c.l.b16 %v85
  %v482 = vunpack.c.l.b16 %v86
  %v483 = vunpack.c.l.b16 %v87
  %v484 = vunpack.c.l.b16 %v88
  %v485 = vunpack.c.l.b16 %v89
  %v486 = vunpack.c.l.b16 %v90
  %v487 = vunpack.c.l.b16 %v91
  %v488 = vunpack.c.l.b16 %v92
  %v489 = vunpack.c.l.b16 %v93
  %v490 = vunpack.c.l.b16 %v94
  %v491 = vunpack.c.l.b16 %v95
  %v492 = vunpack.c.l.b16 %v96
  %v493 = vunpack.c.l.b16 %v97
  %v494 = vunpack.c.l.b16 %v98
  %v495 = vunpack.c.l.b16 %v99
  %v496 = vunpack.c.l.b16 %v100
  %v497 = vunpack.c.l.b16 %v101
  %v498 = vunpack.c.l.b16 %v102
  %v499 = vunpack.c.l.b16 %v103
  %v500 = vunpack.c.l.b16 %v104
  %v501 = vpack.c.b16 %v466, %v465
  %v502 = vpack.c.b16 %v468, %v467
  %v503 = vpack.c.b16 %v470, %v469
  %v504 = vpack.c.b16 %v472, %v471
  %v505 = vpack.c.b16 %v474, %v473
  %v506 = vpack.c.b16 %v476, %v475
  %v507 = vpack.c.b16 %v478, %v477
  %v508 = vpack.c.b16 %v480, %v479
  %v509 = vpack.c.b16 %v482, %v481
  %v510 = vpack.c.b16 %v484, %v483
  %v511 = vpack.c.b16 %v486, %v485
  %v512 = vpack.c.b16 %v488, %v487
  %v513 = vpack.c.b16 %v490, %v489
  %v514 = vpack.c.b16 %v492, %v491
  %v515 = vpack.c.b16 %v494, %v493
  %v516 = vpack.c.b16 %v496, %v495
  %v517 = vpack.c.b16 %v498, %v497
  %v518 = vpack.c.b16 %v500, %v499
  %vm537 = vcmask 261120
  %v539 = vsel %vm537, %v371, 0
  %v542 = vsel %vm537, %v374, 0
  %v545 = vsel %vm537, %v377, 0
  %v548 = vsel %vm537, %v380, 0
  %v551 = vsel %vm537, %v383, 0
  %v554 = vsel %vm537, %v386, 0
  %v557 = vsel %vm537, %v389, 0
  %v560 = vsel %vm537, %v392, 0
  %v563 = vsel %vm537, %v395, 0
  %v566 = vsel %vm537, %v398, 0
  %v569 = vsel %vm537, %v401, 0
  %v572 = vsel %vm537, %v404, 0
  %574 = vmatprep.subr.bf16.mxu0 0
  %575 = vmatpush1.bf16.msra.mxu0 %v508
  %576 = vmatprep.subr.bf16.mxu0 0
  %577 = vmatpush1.bf16.msra.mxu0 %v507
  %578 = vmatprep.subr.bf16.mxu0 0
  %579 = vmatpush1.bf16.msra.mxu0 %v506
  %580 = vmatprep.subr.bf16.mxu0 0
  %581 = vmatpush1.bf16.msra.mxu0 %v505
  %582 = vmatprep.subr.bf16.mxu0 0
  %583 = vmatpush1.bf16.msra.mxu0 %v504
  %584 = vmatprep.subr.bf16.mxu0 0
  %585 = vmatpush1.bf16.msra.mxu0 %v503
  %586 = vmatprep.subr.bf16.mxu0 0
  %587 = vmatpush1.bf16.msra.mxu0 %v502
  %588 = vmatprep.subr.bf16.mxu0 0
  %589 = vmatpush1.bf16.msra.mxu0 %v501
  %590 = vmatprep.subr.bf16.mxu0 0
  %591 = vmatpush2.bf16.msra.mxu0 %v516
  %592 = vmatprep.subr.bf16.mxu0 0
  %593 = vmatpush2.bf16.msra.mxu0 %v515
  %594 = vmatprep.subr.bf16.mxu0 0
  %595 = vmatpush2.bf16.msra.mxu0 %v514
  %596 = vmatprep.subr.bf16.mxu0 0
  %597 = vmatpush2.bf16.msra.mxu0 %v513
  %598 = vmatprep.subr.bf16.mxu0 0
  %599 = vmatpush2.bf16.msra.mxu0 %v512
  %600 = vmatprep.subr.bf16.mxu0 0
  %601 = vmatpush2.bf16.msra.mxu0 %v511
  %602 = vmatprep.subr.bf16.mxu0 0
  %603 = vmatpush2.bf16.msra.mxu0 %v510
  %604 = vmatprep.subr.bf16.mxu0 0
  %605 = vmatpush2.bf16.msra.mxu0 %v509
  %606 = vmatprep.mubr.bf16.mxu0 %v370
  %607 = vmatmul.mubr.bf16.gmra.mxu0 %v369
  %v608 = vpop.f32.mrf.mxu0
  %v609 = vadd.f32 %v132, %v608
  %v610 = vpop.f32.mrf.mxu0
  %v611 = vpop.f32.mrf.mxu0
  %v612 = vadd.f32 %v137, %v611
  %v613 = vpop.f32.mrf.mxu0
  %614 = vmatprep.mubr.bf16.mxu0 %v373
  %615 = vmatmul.mubr.bf16.gmra.mxu0 %v372
  %v616 = vpop.f32.mrf.mxu0
  %v617 = vadd.f32 %v142, %v616
  %v618 = vpop.f32.mrf.mxu0
  %v619 = vpop.f32.mrf.mxu0
  %v620 = vadd.f32 %v147, %v619
  %v621 = vpop.f32.mrf.mxu0
  %622 = vmatprep.mubr.bf16.mxu0 %v376
  %623 = vmatmul.mubr.bf16.gmra.mxu0 %v375
  %v624 = vpop.f32.mrf.mxu0
  %v625 = vadd.f32 %v152, %v624
  %v626 = vpop.f32.mrf.mxu0
  %v627 = vpop.f32.mrf.mxu0
  %v628 = vadd.f32 %v157, %v627
  %v629 = vpop.f32.mrf.mxu0
  %630 = vmatprep.mubr.bf16.mxu0 %v379
  %631 = vmatmul.mubr.bf16.gmra.mxu0 %v378
  %v632 = vpop.f32.mrf.mxu0
  %v633 = vadd.f32 %v162, %v632
  %v634 = vpop.f32.mrf.mxu0
  %v635 = vpop.f32.mrf.mxu0
  %v636 = vadd.f32 %v167, %v635
  %v637 = vpop.f32.mrf.mxu0
  %638 = vmatprep.mubr.bf16.mxu0 %v382
  %639 = vmatmul.mubr.bf16.gmra.mxu0 %v381
  %v640 = vpop.f32.mrf.mxu0
  %v641 = vadd.f32 %v172, %v640
  %v642 = vpop.f32.mrf.mxu0
  %v643 = vpop.f32.mrf.mxu0
  %v644 = vadd.f32 %v177, %v643
  %v645 = vpop.f32.mrf.mxu0
  %646 = vmatprep.mubr.bf16.mxu0 %v385
  %647 = vmatmul.mubr.bf16.gmra.mxu0 %v384
  %v648 = vpop.f32.mrf.mxu0
  %v649 = vadd.f32 %v182, %v648
  %v650 = vpop.f32.mrf.mxu0
  %v651 = vpop.f32.mrf.mxu0
  %v652 = vadd.f32 %v187, %v651
  %v653 = vpop.f32.mrf.mxu0
  %654 = vmatprep.mubr.bf16.mxu0 %v388
  %655 = vmatmul.mubr.bf16.gmra.mxu0 %v387
  %v656 = vpop.f32.mrf.mxu0
  %v657 = vadd.f32 %v192, %v656
  %v658 = vpop.f32.mrf.mxu0
  %v659 = vpop.f32.mrf.mxu0
  %v660 = vadd.f32 %v197, %v659
  %v661 = vpop.f32.mrf.mxu0
  %662 = vmatprep.mubr.bf16.mxu0 %v391
  %663 = vmatmul.mubr.bf16.gmra.mxu0 %v390
  %v664 = vpop.f32.mrf.mxu0
  %v665 = vadd.f32 %v202, %v664
  %v666 = vpop.f32.mrf.mxu0
  %v667 = vpop.f32.mrf.mxu0
  %v668 = vadd.f32 %v207, %v667
  %v669 = vpop.f32.mrf.mxu0
  %670 = vmatprep.mubr.bf16.mxu0 %v394
  %671 = vmatmul.mubr.bf16.gmra.mxu0 %v393
  %v672 = vpop.f32.mrf.mxu0
  %v673 = vadd.f32 %v212, %v672
  %v674 = vpop.f32.mrf.mxu0
  %v675 = vpop.f32.mrf.mxu0
  %v676 = vadd.f32 %v217, %v675
  %v677 = vpop.f32.mrf.mxu0
  %678 = vmatprep.mubr.bf16.mxu0 %v397
  %679 = vmatmul.mubr.bf16.gmra.mxu0 %v396
  %v680 = vpop.f32.mrf.mxu0
  %v681 = vadd.f32 %v222, %v680
  %v682 = vpop.f32.mrf.mxu0
  %v683 = vpop.f32.mrf.mxu0
  %v684 = vadd.f32 %v227, %v683
  %v685 = vpop.f32.mrf.mxu0
  %686 = vmatprep.mubr.bf16.mxu0 %v400
  %687 = vmatmul.mubr.bf16.gmra.mxu0 %v399
  %v688 = vpop.f32.mrf.mxu0
  %v689 = vadd.f32 %v232, %v688
  %v690 = vpop.f32.mrf.mxu0
  %v691 = vpop.f32.mrf.mxu0
  %v692 = vadd.f32 %v237, %v691
  %v693 = vpop.f32.mrf.mxu0
  %694 = vmatprep.mubr.bf16.mxu0 %v403
  %695 = vmatmul.mubr.bf16.gmra.mxu0 %v402
  %v696 = vpop.f32.mrf.mxu0
  %v697 = vadd.f32 %v242, %v696
  %v698 = vpop.f32.mrf.mxu0
  %v699 = vpop.f32.mrf.mxu0
  %v700 = vadd.f32 %v247, %v699
  %v701 = vpop.f32.mrf.mxu0
  %702 = vdwg.mxu0
  %703 = vmatprep.subr.bf16.mxu0 0
  %704 = vmatpush1.bf16.msra.mxu0 0
  %705 = vmatprep.subr.bf16.mxu0 0
  %706 = vmatpush1.bf16.msra.mxu0 0
  %707 = vmatprep.subr.bf16.mxu0 0
  %708 = vmatpush1.bf16.msra.mxu0 0
  %709 = vmatprep.subr.bf16.mxu0 0
  %710 = vmatpush1.bf16.msra.mxu0 0
  %711 = vmatprep.subr.bf16.mxu0 0
  %712 = vmatpush1.bf16.msra.mxu0 0
  %713 = vmatprep.subr.bf16.mxu0 0
  %714 = vmatpush1.bf16.msra.mxu0 0
  %715 = vmatprep.subr.bf16.mxu0 0
  %716 = vmatpush1.bf16.msra.mxu0 %v518
  %717 = vmatprep.subr.bf16.mxu0 0
  %718 = vmatpush1.bf16.msra.mxu0 %v517
  %719 = vmatprep.subr.bf16.mxu0 0
  %720 = vmatpush2.bf16.msra.mxu0 0
  %721 = vmatprep.subr.bf16.mxu0 0
  %722 = vmatpush2.bf16.msra.mxu0 0
  %723 = vmatprep.subr.bf16.mxu0 0
  %724 = vmatpush2.bf16.msra.mxu0 0
  %725 = vmatprep.subr.bf16.mxu0 0
  %726 = vmatpush2.bf16.msra.mxu0 0
  %727 = vmatprep.subr.bf16.mxu0 0
  %728 = vmatpush2.bf16.msra.mxu0 0
  %729 = vmatprep.subr.bf16.mxu0 0
  %730 = vmatpush2.bf16.msra.mxu0 0
  %731 = vmatprep.subr.bf16.mxu0 0
  %732 = vmatpush2.bf16.msra.mxu0 0
  %733 = vmatprep.subr.bf16.mxu0 0
  %734 = vmatpush2.bf16.msra.mxu0 0
  %735 = vmatprep.mubr.bf16.mxu0 0
  %736 = vmatmul.mubr.bf16.gmra.mxu0 %v539
  %v737 = vpop.f32.mrf.mxu0
  %v738 = vadd.f32 %v609, %v737
  %v739 = vpop.f32.mrf.mxu0
  %v740 = vpop.f32.mrf.mxu0
  %v741 = vadd.f32 %v612, %v740
  %v742 = vpop.f32.mrf.mxu0
  %743 = vmatprep.mubr.bf16.mxu0 0
  %744 = vmatmul.mubr.bf16.gmra.mxu0 %v542
  %v745 = vpop.f32.mrf.mxu0
  %v746 = vadd.f32 %v617, %v745
  %v747 = vpop.f32.mrf.mxu0
  %v748 = vpop.f32.mrf.mxu0
  %v749 = vadd.f32 %v620, %v748
  %v750 = vpop.f32.mrf.mxu0
  %751 = vmatprep.mubr.bf16.mxu0 0
  %752 = vmatmul.mubr.bf16.gmra.mxu0 %v545
  %v753 = vpop.f32.mrf.mxu0
  %v754 = vadd.f32 %v625, %v753
  %v755 = vpop.f32.mrf.mxu0
  %v756 = vpop.f32.mrf.mxu0
  %v757 = vadd.f32 %v628, %v756
  %v758 = vpop.f32.mrf.mxu0
  %759 = vmatprep.mubr.bf16.mxu0 0
  %760 = vmatmul.mubr.bf16.gmra.mxu0 %v548
  %v761 = vpop.f32.mrf.mxu0
  %v762 = vadd.f32 %v633, %v761
  %v763 = vpop.f32.mrf.mxu0
  %v764 = vpop.f32.mrf.mxu0
  %v765 = vadd.f32 %v636, %v764
  %v766 = vpop.f32.mrf.mxu0
  %767 = vmatprep.mubr.bf16.mxu0 0
  %768 = vmatmul.mubr.bf16.gmra.mxu0 %v551
  %v769 = vpop.f32.mrf.mxu0
  %v770 = vadd.f32 %v641, %v769
  %v771 = vpop.f32.mrf.mxu0
  %v772 = vpop.f32.mrf.mxu0
  %v773 = vadd.f32 %v644, %v772
  %v774 = vpop.f32.mrf.mxu0
  %775 = vmatprep.mubr.bf16.mxu0 0
  %776 = vmatmul.mubr.bf16.gmra.mxu0 %v554
  %v777 = vpop.f32.mrf.mxu0
  %v778 = vadd.f32 %v649, %v777
  %v779 = vpop.f32.mrf.mxu0
  %v780 = vpop.f32.mrf.mxu0
  %v781 = vadd.f32 %v652, %v780
  %v782 = vpop.f32.mrf.mxu0
  %783 = vmatprep.mubr.bf16.mxu0 0
  %784 = vmatmul.mubr.bf16.gmra.mxu0 %v557
  %v785 = vpop.f32.mrf.mxu0
  %v786 = vadd.f32 %v657, %v785
  %v787 = vpop.f32.mrf.mxu0
  %v788 = vpop.f32.mrf.mxu0
  %v789 = vadd.f32 %v660, %v788
  %v790 = vpop.f32.mrf.mxu0
  %791 = vmatprep.mubr.bf16.mxu0 0
  %792 = vmatmul.mubr.bf16.gmra.mxu0 %v560
  %v793 = vpop.f32.mrf.mxu0
  %v794 = vadd.f32 %v665, %v793
  %v795 = vpop.f32.mrf.mxu0
  %v796 = vpop.f32.mrf.mxu0
  %v797 = vadd.f32 %v668, %v796
  %v798 = vpop.f32.mrf.mxu0
  %799 = vmatprep.mubr.bf16.mxu0 0
  %800 = vmatmul.mubr.bf16.gmra.mxu0 %v563
  %v801 = vpop.f32.mrf.mxu0
  %v802 = vadd.f32 %v673, %v801
  %v803 = vpop.f32.mrf.mxu0
  %v804 = vpop.f32.mrf.mxu0
  %v805 = vadd.f32 %v676, %v804
  %v806 = vpop.f32.mrf.mxu0
  %807 = vmatprep.mubr.bf16.mxu0 0
  %808 = vmatmul.mubr.bf16.gmra.mxu0 %v566
  %v809 = vpop.f32.mrf.mxu0
  %v810 = vadd.f32 %v681, %v809
  %v811 = vpop.f32.mrf.mxu0
  %v812 = vpop.f32.mrf.mxu0
  %v813 = vadd.f32 %v684, %v812
  %v814 = vpop.f32.mrf.mxu0
  %815 = vmatprep.mubr.bf16.mxu0 0
  %816 = vmatmul.mubr.bf16.gmra.mxu0 %v569
  %v817 = vpop.f32.mrf.mxu0
  %v818 = vadd.f32 %v689, %v817
  %v819 = vpop.f32.mrf.mxu0
  %v820 = vpop.f32.mrf.mxu0
  %v821 = vadd.f32 %v692, %v820
  %v822 = vpop.f32.mrf.mxu0
  %823 = vmatprep.mubr.bf16.mxu0 0
  %824 = vmatmul.mubr.bf16.gmra.mxu0 %v572
  %v825 = vpop.f32.mrf.mxu0
  %v826 = vadd.f32 %v697, %v825
  %v827 = vpop.f32.mrf.mxu0
  %v828 = vpop.f32.mrf.mxu0
  %v829 = vadd.f32 %v700, %v828
  %v830 = vpop.f32.mrf.mxu0
  %831 = vdwg.mxu0
  %v832 = vlaneseq
  %v833 = vand.u32 %v832, 127
  %vm834 = vcmp.lt.s32.totalorder %v833, 64
  %v835 = vsel %vm834, %v738, %v746
  %v836 = vsel %vm834, %v741, %v749
  %v837 = vsel %vm834, %v754, %v762
  %v838 = vsel %vm834, %v757, %v765
  %v839 = vmul.f32 %v835, %v770
  %v840 = vmul.f32 %v836, %v773
  %v841 = vadd.f32 %v839, %v840
  %v842 = vmul.f32 %v835, %v778
  %v843 = vmul.f32 %v836, %v781
  %v844 = vadd.f32 %v842, %v843
  %v845 = vmul.f32 %v835, %v786
  %v846 = vmul.f32 %v836, %v789
  %v847 = vadd.f32 %v845, %v846
  %v848 = vmul.f32 %v835, %v794
  %v849 = vmul.f32 %v836, %v797
  %v850 = vadd.f32 %v848, %v849
  %v851 = vmax.f32 %v841, %v844
  %v852 = vmax.f32 %v847, %v850
  %v853 = vmax.f32 %v851, %v852
  %v854 = vsub.f32 %v841, %v853
  %v855 = vmul.f32 %v854, 1.442695
  %v856 = vpow.pop %v855
  %v857 = vsub.f32 %v844, %v853
  %v858 = vmul.f32 %v857, 1.442695
  %v859 = vpow.pop %v858
  %v860 = vsub.f32 %v847, %v853
  %v861 = vmul.f32 %v860, 1.442695
  %v862 = vpow.pop %v861
  %v863 = vsub.f32 %v850, %v853
  %v864 = vmul.f32 %v863, 1.442695
  %v865 = vpow.pop %v864
  %v866 = vadd.f32 %v856, %v859
  %v867 = vadd.f32 %v866, %v862
  %v868 = vadd.f32 %v867, %v865
  %v869 = vrcp.pop %v868
  %v870 = vmul.f32 %v856, %v869
  %v871 = vmul.f32 %v859, %v869
  %v872 = vmul.f32 %v862, %v869
  %v873 = vmul.f32 %v865, %v869
  %v874 = vmul.f32 %v870, %v802
  %v875 = vmul.f32 %v871, %v810
  %v876 = vadd.f32 %v874, %v875
  %v877 = vmul.f32 %v872, %v818
  %v878 = vadd.f32 %v876, %v877
  %v879 = vmul.f32 %v873, %v826
  %v880 = vadd.f32 %v878, %v879
  %v881 = vmul.f32 %v870, %v805
  %v882 = vmul.f32 %v871, %v813
  %v883 = vadd.f32 %v881, %v882
  %v884 = vmul.f32 %v872, %v821
  %v885 = vadd.f32 %v883, %v884
  %v886 = vmul.f32 %v873, %v829
  %v887 = vadd.f32 %v885, %v886
  %888 = vrot.lane.b32.xlu0 %v887, 64
  %v889 = vpop.permute.xlu0 %888
  %v890 = vsel %vm834, %v880, %v889
  %891 = vrot.lane.b32.xlu0 %v880, 64
  %v892 = vpop.permute.xlu0 %891
  %v893 = vsel %vm834, %v892, %v887
  %v894 = vmul.f32 %v837, %v770
  %v895 = vmul.f32 %v838, %v773
  %v896 = vadd.f32 %v894, %v895
  %v897 = vmul.f32 %v837, %v778
  %v898 = vmul.f32 %v838, %v781
  %v899 = vadd.f32 %v897, %v898
  %v900 = vmul.f32 %v837, %v786
  %v901 = vmul.f32 %v838, %v789
  %v902 = vadd.f32 %v900, %v901
  %v903 = vmul.f32 %v837, %v794
  %v904 = vmul.f32 %v838, %v797
  %v905 = vadd.f32 %v903, %v904
  %v906 = vmax.f32 %v896, %v899
  %v907 = vmax.f32 %v902, %v905
  %v908 = vmax.f32 %v906, %v907
  %v909 = vsub.f32 %v896, %v908
  %v910 = vmul.f32 %v909, 1.442695
  %v911 = vpow.pop %v910
  %v912 = vsub.f32 %v899, %v908
  %v913 = vmul.f32 %v912, 1.442695
  %v914 = vpow.pop %v913
  %v915 = vsub.f32 %v902, %v908
  %v916 = vmul.f32 %v915, 1.442695
  %v917 = vpow.pop %v916
  %v918 = vsub.f32 %v905, %v908
  %v919 = vmul.f32 %v918, 1.442695
  %v920 = vpow.pop %v919
  %v921 = vadd.f32 %v911, %v914
  %v922 = vadd.f32 %v921, %v917
  %v923 = vadd.f32 %v922, %v920
  %v924 = vrcp.pop %v923
  %v925 = vmul.f32 %v911, %v924
  %v926 = vmul.f32 %v914, %v924
  %v927 = vmul.f32 %v917, %v924
  %v928 = vmul.f32 %v920, %v924
  %v929 = vmul.f32 %v925, %v802
  %v930 = vmul.f32 %v926, %v810
  %v931 = vadd.f32 %v929, %v930
  %v932 = vmul.f32 %v927, %v818
  %v933 = vadd.f32 %v931, %v932
  %v934 = vmul.f32 %v928, %v826
  %v935 = vadd.f32 %v933, %v934
  %v936 = vmul.f32 %v925, %v805
  %v937 = vmul.f32 %v926, %v813
  %v938 = vadd.f32 %v936, %v937
  %v939 = vmul.f32 %v927, %v821
  %v940 = vadd.f32 %v938, %v939
  %v941 = vmul.f32 %v928, %v829
  %v942 = vadd.f32 %v940, %v941
  %943 = vrot.lane.b32.xlu0 %v942, 64
  %v944 = vpop.permute.xlu0 %943
  %v945 = vsel %vm834, %v935, %v944
  %946 = vrot.lane.b32.xlu0 %v935, 64
  %v947 = vpop.permute.xlu0 %946
  %v948 = vsel %vm834, %v947, %v942
  %v949 = vpack.c.bf16 %v893, %v890
  %v950 = vpack.c.bf16 %v948, %v945
  %v951 = vld [vmem:[%s3] sm:$0xf]
  %v952 = vld [vmem:[%s3 + $0x4] sm:$0xf]
  %v953 = vld [vmem:[%s3 + $0x8] sm:$0xf]
  %v954 = vld [vmem:[%s3 + $0xc] sm:$0xf]
  %v955 = vld [vmem:[%s3 + $0x10] sm:$0xf]
  %v956 = vld [vmem:[%s3 + $0x14] sm:$0xf]
  %v957 = vld [vmem:[%s3 + $0x18] sm:$0xf]
  %v958 = vld [vmem:[%s3 + $0x1c] sm:$0xf]
  %v959 = vld [vmem:[%s3 + $0x20] sm:$0xf]
  %v960 = vld [vmem:[%s3 + $0x24] sm:$0xf]
  %v961 = vld [vmem:[%s3 + $0x28] sm:$0xf]
  %v962 = vld [vmem:[%s3 + $0x2c] sm:$0xf]
  %v963 = vld [vmem:[%s3 + $0x30] sm:$0xf]
  %v964 = vld [vmem:[%s3 + $0x34] sm:$0xf]
  %v965 = vld [vmem:[%s3 + $0x38] sm:$0xf]
  %v966 = vld [vmem:[%s3 + $0x3c] sm:$0xf]
  %v967 = vld [vmem:[%s4] sm:$0x1]
  %v969 = vlaneseq
  %v970 = vshrl.u32 %v969, 7
  %v971 = vsub.s32 0, %v970
  %v972 = vrot.slane %v967, %v971
  %v990 = vunpack.c.l.b16 %v951
  %v991 = vunpack.c.l.b16 %v952
  %v992 = vunpack.c.l.b16 %v953
  %v993 = vunpack.c.l.b16 %v954
  %v994 = vunpack.c.l.b16 %v955
  %v995 = vunpack.c.l.b16 %v956
  %v996 = vunpack.c.l.b16 %v957
  %v997 = vunpack.c.l.b16 %v958
  %v998 = vunpack.c.l.b16 %v959
  %v999 = vunpack.c.l.b16 %v960
  %v1000 = vunpack.c.l.b16 %v961
  %v1001 = vunpack.c.l.b16 %v962
  %v1002 = vunpack.c.l.b16 %v963
  %v1003 = vunpack.c.l.b16 %v964
  %v1004 = vunpack.c.l.b16 %v965
  %v1005 = vunpack.c.l.b16 %v966
  %v1006 = vpack.c.b16 %v991, %v990
  %v1007 = vpack.c.b16 %v993, %v992
  %v1008 = vpack.c.b16 %v995, %v994
  %v1009 = vpack.c.b16 %v997, %v996
  %v1010 = vpack.c.b16 %v999, %v998
  %v1011 = vpack.c.b16 %v1001, %v1000
  %v1012 = vpack.c.b16 %v1003, %v1002
  %v1013 = vpack.c.b16 %v1005, %v1004
  %1022 = vmatprep.subr.bf16.mxu0 0
  %1023 = vmatpush1.bf16.msra.mxu0 %v1013
  %1024 = vmatprep.subr.bf16.mxu0 0
  %1025 = vmatpush1.bf16.msra.mxu0 %v1012
  %1026 = vmatprep.subr.bf16.mxu0 0
  %1027 = vmatpush1.bf16.msra.mxu0 %v1011
  %1028 = vmatprep.subr.bf16.mxu0 0
  %1029 = vmatpush1.bf16.msra.mxu0 %v1010
  %1030 = vmatprep.subr.bf16.mxu0 0
  %1031 = vmatpush1.bf16.msra.mxu0 %v1009
  %1032 = vmatprep.subr.bf16.mxu0 0
  %1033 = vmatpush1.bf16.msra.mxu0 %v1008
  %1034 = vmatprep.subr.bf16.mxu0 0
  %1035 = vmatpush1.bf16.msra.mxu0 %v1007
  %1036 = vmatprep.subr.bf16.mxu0 0
  %1037 = vmatpush1.bf16.msra.mxu0 %v1006
  %1038 = vmatprep.subr.bf16.mxu0 0
  %1039 = vmatpush2.bf16.msra.mxu0 0
  %1040 = vmatprep.subr.bf16.mxu0 0
  %1041 = vmatpush2.bf16.msra.mxu0 0
  %1042 = vmatprep.subr.bf16.mxu0 0
  %1043 = vmatpush2.bf16.msra.mxu0 0
  %1044 = vmatprep.subr.bf16.mxu0 0
  %1045 = vmatpush2.bf16.msra.mxu0 0
  %1046 = vmatprep.subr.bf16.mxu0 0
  %1047 = vmatpush2.bf16.msra.mxu0 0
  %1048 = vmatprep.subr.bf16.mxu0 0
  %1049 = vmatpush2.bf16.msra.mxu0 0
  %1050 = vmatprep.subr.bf16.mxu0 0
  %1051 = vmatpush2.bf16.msra.mxu0 0
  %1052 = vmatprep.subr.bf16.mxu0 0
  %1053 = vmatpush2.bf16.msra.mxu0 0
  %1054 = vmatprep.mubr.bf16.mxu0 0
  %1055 = vmatmul.mubr.bf16.gmra.mxu0 %v949
  %v1056 = vpop.f32.mrf.mxu0
  %v1057 = vadd.f32 %v972, %v1056
  %v1058 = vpop.f32.mrf.mxu0
  %v1059 = vpop.f32.mrf.mxu0
  %v1060 = vadd.f32 %v972, %v1059
  %v1061 = vpop.f32.mrf.mxu0
  %1062 = vmatprep.mubr.bf16.mxu0 0
  %1063 = vmatmul.mubr.bf16.gmra.mxu0 %v950
  %v1064 = vpop.f32.mrf.mxu0
  %v1065 = vadd.f32 %v972, %v1064
  %v1066 = vpop.f32.mrf.mxu0
  %v1067 = vpop.f32.mrf.mxu0
  %v1068 = vadd.f32 %v972, %v1067
  %v1069 = vpop.f32.mrf.mxu0
  %1070 = vdwg.mxu0
  %1071 = vst [vmem:[%s5] sm:$0xff] %v1057
  %1072 = vst [vmem:[%s5 + $0x8] sm:$0xff] %v1060
  %1073 = vst [vmem:[%s5 + $0x10] sm:$0xff] %v1065
  %1074 = vst [vmem:[%s5 + $0x18] sm:$0xff] %v1068
  // Predicated region
  $region22: #{attention_guided_conv.1} parent=0 // pred_check
    _
  $region23: #{attention_guided_conv.1} parent=0 // pred_check_branch
    %1076 = sbr.rel (0) target = $region25
  $region24: #{attention_guided_conv.1} parent=0 // pred_region
    _
  $region25: #{attention_guided_conv.1} parent=0 // pred_fallthru
    _
  // Predicated region
  $region26: #{attention_guided_conv.1} parent=0 // pred_check
    _
  $region27: #{attention_guided_conv.1} parent=0 // pred_check_branch
    %1078 = sbr.rel (0) target = $region29
  $region28: #{attention_guided_conv.1} parent=0 // pred_region
    _
  $region29: #{attention_guided_conv.1} parent=0 // pred_fallthru
    _

</llo_original>
